<compile_context>
chip_gen: v7x
topology: tpu7x:2x2x1
jax: 0.10.0
libtpu: 0.0.40
codegen_flags: <defaults>
</compile_context>

<pallas_src>
import jax
import jax.numpy as jnp
from jax.experimental import pallas as pl
from jax.experimental.pallas import tpu as pltpu


def _make_conv2x_kernel(C, OC, H, W, KH, KW, TILE_N):
    HW = H * W
    KK = KH * KW

    def kernel(w_ref, x_ref, o_ref):
        # w_ref: (OC*C*KH*KW,) f32 in SMEM   (flat scalar table)
        # x_ref: (C, TILE_N, HW) f32 in VMEM (channel-major, lane-dense)
        # o_ref: (OC, TILE_N, HW) f32 in VMEM
        #
        # Hoist the C*KH*KW shifted windows out of the oc loop.  Each window is a static
        # lane-roll of the flat H*W axis: win[c][k][n, p] = x[c, n, p + ki*W + kj] for every
        # output position p that survives the final wrapper slice (valid p never wraps).
        win = []
        for c in range(C):
            xc = x_ref[c]                                        # (TILE_N, HW), contiguous load
            per_c = []
            for ki in range(KH):
                for kj in range(KW):
                    s = ki * W + kj
                    per_c.append(xc if s == 0 else pltpu.roll(xc, shift=HW - s, axis=1))
            win.append(per_c)

        for oc in range(OC):
            acc = jnp.zeros((TILE_N, HW), jnp.float32)
            for c in range(C):
                base = (oc * C + c) * KK
                for k in range(KK):
                    # seq_1(x) + seq_2(x) with a shared conv (bias=False) == 2 * conv(x):
                    # fold the x2 into the SMEM scalar read (free scalar-ALU slot).
                    w = 2.0 * w_ref[base + k]
                    acc = acc + w * win[c][k]                    # (TILE_N, HW) VPU FMA
            o_ref[oc] = acc                                      # full-lane unmasked store

    return kernel


@jax.jit
def testmodel2_forward_pallas(x_nchw, weight):
    """TestModel2.forward: seq_1(x) + seq_2(x), shared nn.Conv2d(3, 3, (2, 2), bias=False)."""
    N, C, H, W = x_nchw.shape
    OC, IC, KH, KW = weight.shape
    assert IC == C
    Ho, Wo = H - KH + 1, W - KW + 1
    HW = H * W

    # Whole batch in one step when small; otherwise 8 images per step so batch fills the
    # sublane axis while the 12 hoisted windows stay vreg-resident (VMEM is never the limiter).
    if N <= 8 or N % 8 != 0:
        TILE_N = N
    else:
        TILE_N = 8
    n_steps = N // TILE_N

    # Wrapper-side layout plumbing (cheap): channel-major + flat spatial axis so the kernel
    # sees lane-dense (>=128-lane) contiguous rows for both loads and stores.
    x_cm = jnp.transpose(x_nchw, (1, 0, 2, 3)).reshape(C, N, HW)
    w_flat = weight.reshape(OC * C * KH * KW)                    # 1-D SMEM table (36,)

    kernel = _make_conv2x_kernel(C, OC, H, W, KH, KW, TILE_N)

    out_cm = pl.pallas_call(
        kernel,
        out_shape=jax.ShapeDtypeStruct((OC, N, HW), jnp.float32),
        grid=(n_steps,),
        in_specs=[
            pl.BlockSpec(memory_space=pltpu.MemorySpace.SMEM),          # weights, no VMEM stream
            pl.BlockSpec((C, TILE_N, HW), lambda i: (0, i, 0)),         # TILE_N images per step
        ],
        out_specs=pl.BlockSpec((OC, TILE_N, HW), lambda i: (0, i, 0)),
        compiler_params=pltpu.CompilerParams(
            dimension_semantics=("arbitrary",)),
    )(w_flat, x_cm)

    # Back to NCHW and drop the conv-invalid tail rows/cols (tiny slice, pure layout plumbing).
    out = jnp.transpose(out_cm.reshape(OC, N, H, W), (1, 0, 2, 3))
    return out[:, :, :Ho, :Wo]


if __name__ == "__main__":
    key = jax.random.PRNGKey(0)
    kx, kwt = jax.random.split(key, 2)

    # nn.Conv2d(3, 3, (2, 2), bias=False) shared by seq_1 and seq_2.
    N, C, H, W = 2, 3, 16, 16
    OC, KH, KW = 3, 2, 2

    x = jax.random.normal(kx, (N, C, H, W), dtype=jnp.float32)
    weight = jax.random.normal(kwt, (OC, C, KH, KW), dtype=jnp.float32) * 0.1

    out = jax.block_until_ready(testmodel2_forward_pallas(x, weight))

    # Pure-JAX reference: seq_1(x) + seq_2(x) == 2 * conv(x).
    ref = 2.0 * jax.lax.conv_general_dilated(
        x, weight, window_strides=(1, 1), padding="VALID",
        dimension_numbers=("NCHW", "OIHW", "NCHW"),
    )
    assert out.shape == (N, OC, H - KH + 1, W - KW + 1), out.shape
    assert jnp.allclose(out, ref, atol=1e-4, rtol=1e-4), float(
        jnp.max(jnp.abs(out - ref)))

    print("KERNEL_OK")
</pallas_src>

<mosaic_0001>
module attributes {stable_mosaic.version = 11 : i64} {
  func.func @kernel(%arg0: i32, %arg1: memref<36xf32, #tpu.memory_space<smem>>, %arg2: memref<3x2x256xf32, #tpu.memory_space<vmem>>, %arg3: memref<3x2x256xf32, #tpu.memory_space<vmem>>) attributes {dimension_semantics = [#tpu.dimension_semantics<arbitrary>], iteration_bounds = array<i64: 1>, scalar_prefetch = 0 : i64, scratch_operands = 0 : i64, tpu.core_type = #tpu.core_type<tc>, window_params = [{transform_indices = @transform_0, window_bounds = array<i64: 36>}, {transform_indices = @transform_1, window_bounds = array<i64: 3, 2, 256>}, {transform_indices = @transform_2, window_bounds = array<i64: 3, 2, 256>}]} {
    %c0 = arith.constant 0 : index
    %c0_0 = arith.constant 0 : index
    %c0_1 = arith.constant 0 : index
    %0 = vector.load %arg2[%c0, %c0_0, %c0_1] : memref<3x2x256xf32, #tpu.memory_space<vmem>>, vector<1x2x256xf32>
    %1 = vector.shape_cast %0 : vector<1x2x256xf32> to vector<2x256xf32>
    %c255_i32 = arith.constant 255 : i32
    %2 = tpu.dynamic_rotate %1 by %c255_i32 dim 1 : vector<2x256xf32>, i32 -> vector<2x256xf32>
    %c240_i32 = arith.constant 240 : i32
    %3 = tpu.dynamic_rotate %1 by %c240_i32 dim 1 : vector<2x256xf32>, i32 -> vector<2x256xf32>
    %c239_i32 = arith.constant 239 : i32
    %4 = tpu.dynamic_rotate %1 by %c239_i32 dim 1 : vector<2x256xf32>, i32 -> vector<2x256xf32>
    %c1 = arith.constant 1 : index
    %c0_2 = arith.constant 0 : index
    %c0_3 = arith.constant 0 : index
    %5 = vector.load %arg2[%c1, %c0_2, %c0_3] : memref<3x2x256xf32, #tpu.memory_space<vmem>>, vector<1x2x256xf32>
    %6 = vector.shape_cast %5 : vector<1x2x256xf32> to vector<2x256xf32>
    %c255_i32_4 = arith.constant 255 : i32
    %7 = tpu.dynamic_rotate %6 by %c255_i32_4 dim 1 : vector<2x256xf32>, i32 -> vector<2x256xf32>
    %c240_i32_5 = arith.constant 240 : i32
    %8 = tpu.dynamic_rotate %6 by %c240_i32_5 dim 1 : vector<2x256xf32>, i32 -> vector<2x256xf32>
    %c239_i32_6 = arith.constant 239 : i32
    %9 = tpu.dynamic_rotate %6 by %c239_i32_6 dim 1 : vector<2x256xf32>, i32 -> vector<2x256xf32>
    %c2 = arith.constant 2 : index
    %c0_7 = arith.constant 0 : index
    %c0_8 = arith.constant 0 : index
    %10 = vector.load %arg2[%c2, %c0_7, %c0_8] : memref<3x2x256xf32, #tpu.memory_space<vmem>>, vector<1x2x256xf32>
    %11 = vector.shape_cast %10 : vector<1x2x256xf32> to vector<2x256xf32>
    %c255_i32_9 = arith.constant 255 : i32
    %12 = tpu.dynamic_rotate %11 by %c255_i32_9 dim 1 : vector<2x256xf32>, i32 -> vector<2x256xf32>
    %c240_i32_10 = arith.constant 240 : i32
    %13 = tpu.dynamic_rotate %11 by %c240_i32_10 dim 1 : vector<2x256xf32>, i32 -> vector<2x256xf32>
    %c239_i32_11 = arith.constant 239 : i32
    %14 = tpu.dynamic_rotate %11 by %c239_i32_11 dim 1 : vector<2x256xf32>, i32 -> vector<2x256xf32>
    %cst = arith.constant 0.000000e+00 : f32
    %15 = vector.broadcast %cst : f32 to vector<2x256xf32>
    %c0_12 = arith.constant 0 : index
    %16 = memref.load %arg1[%c0_12] : memref<36xf32, #tpu.memory_space<smem>>
    %cst_13 = arith.constant 2.000000e+00 : f32
    %17 = arith.mulf %cst_13, %16 : f32
    %18 = vector.broadcast %17 : f32 to vector<2x256xf32>
    %19 = arith.mulf %18, %1 : vector<2x256xf32>
    %20 = arith.addf %15, %19 : vector<2x256xf32>
    %c1_14 = arith.constant 1 : index
    %21 = memref.load %arg1[%c1_14] : memref<36xf32, #tpu.memory_space<smem>>
    %cst_15 = arith.constant 2.000000e+00 : f32
    %22 = arith.mulf %cst_15, %21 : f32
    %23 = vector.broadcast %22 : f32 to vector<2x256xf32>
    %24 = arith.mulf %23, %2 : vector<2x256xf32>
    %25 = arith.addf %20, %24 : vector<2x256xf32>
    %c2_16 = arith.constant 2 : index
    %26 = memref.load %arg1[%c2_16] : memref<36xf32, #tpu.memory_space<smem>>
    %cst_17 = arith.constant 2.000000e+00 : f32
    %27 = arith.mulf %cst_17, %26 : f32
    %28 = vector.broadcast %27 : f32 to vector<2x256xf32>
    %29 = arith.mulf %28, %3 : vector<2x256xf32>
    %30 = arith.addf %25, %29 : vector<2x256xf32>
    %c3 = arith.constant 3 : index
    %31 = memref.load %arg1[%c3] : memref<36xf32, #tpu.memory_space<smem>>
    %cst_18 = arith.constant 2.000000e+00 : f32
    %32 = arith.mulf %cst_18, %31 : f32
    %33 = vector.broadcast %32 : f32 to vector<2x256xf32>
    %34 = arith.mulf %33, %4 : vector<2x256xf32>
    %35 = arith.addf %30, %34 : vector<2x256xf32>
    %c4 = arith.constant 4 : index
    %36 = memref.load %arg1[%c4] : memref<36xf32, #tpu.memory_space<smem>>
    %cst_19 = arith.constant 2.000000e+00 : f32
    %37 = arith.mulf %cst_19, %36 : f32
    %38 = vector.broadcast %37 : f32 to vector<2x256xf32>
    %39 = arith.mulf %38, %6 : vector<2x256xf32>
    %40 = arith.addf %35, %39 : vector<2x256xf32>
    %c5 = arith.constant 5 : index
    %41 = memref.load %arg1[%c5] : memref<36xf32, #tpu.memory_space<smem>>
    %cst_20 = arith.constant 2.000000e+00 : f32
    %42 = arith.mulf %cst_20, %41 : f32
    %43 = vector.broadcast %42 : f32 to vector<2x256xf32>
    %44 = arith.mulf %43, %7 : vector<2x256xf32>
    %45 = arith.addf %40, %44 : vector<2x256xf32>
    %c6 = arith.constant 6 : index
    %46 = memref.load %arg1[%c6] : memref<36xf32, #tpu.memory_space<smem>>
    %cst_21 = arith.constant 2.000000e+00 : f32
    %47 = arith.mulf %cst_21, %46 : f32
    %48 = vector.broadcast %47 : f32 to vector<2x256xf32>
    %49 = arith.mulf %48, %8 : vector<2x256xf32>
    %50 = arith.addf %45, %49 : vector<2x256xf32>
    %c7 = arith.constant 7 : index
    %51 = memref.load %arg1[%c7] : memref<36xf32, #tpu.memory_space<smem>>
    %cst_22 = arith.constant 2.000000e+00 : f32
    %52 = arith.mulf %cst_22, %51 : f32
    %53 = vector.broadcast %52 : f32 to vector<2x256xf32>
    %54 = arith.mulf %53, %9 : vector<2x256xf32>
    %55 = arith.addf %50, %54 : vector<2x256xf32>
    %c8 = arith.constant 8 : index
    %56 = memref.load %arg1[%c8] : memref<36xf32, #tpu.memory_space<smem>>
    %cst_23 = arith.constant 2.000000e+00 : f32
    %57 = arith.mulf %cst_23, %56 : f32
    %58 = vector.broadcast %57 : f32 to vector<2x256xf32>
    %59 = arith.mulf %58, %11 : vector<2x256xf32>
    %60 = arith.addf %55, %59 : vector<2x256xf32>
    %c9 = arith.constant 9 : index
    %61 = memref.load %arg1[%c9] : memref<36xf32, #tpu.memory_space<smem>>
    %cst_24 = arith.constant 2.000000e+00 : f32
    %62 = arith.mulf %cst_24, %61 : f32
    %63 = vector.broadcast %62 : f32 to vector<2x256xf32>
    %64 = arith.mulf %63, %12 : vector<2x256xf32>
    %65 = arith.addf %60, %64 : vector<2x256xf32>
    %c10 = arith.constant 10 : index
    %66 = memref.load %arg1[%c10] : memref<36xf32, #tpu.memory_space<smem>>
    %cst_25 = arith.constant 2.000000e+00 : f32
    %67 = arith.mulf %cst_25, %66 : f32
    %68 = vector.broadcast %67 : f32 to vector<2x256xf32>
    %69 = arith.mulf %68, %13 : vector<2x256xf32>
    %70 = arith.addf %65, %69 : vector<2x256xf32>
    %c11 = arith.constant 11 : index
    %71 = memref.load %arg1[%c11] : memref<36xf32, #tpu.memory_space<smem>>
    %cst_26 = arith.constant 2.000000e+00 : f32
    %72 = arith.mulf %cst_26, %71 : f32
    %73 = vector.broadcast %72 : f32 to vector<2x256xf32>
    %74 = arith.mulf %73, %14 : vector<2x256xf32>
    %75 = arith.addf %70, %74 : vector<2x256xf32>
    %c0_27 = arith.constant 0 : index
    %c0_28 = arith.constant 0 : index
    %c0_29 = arith.constant 0 : index
    %76 = vector.load %arg3[%c0_27, %c0_28, %c0_29] : memref<3x2x256xf32, #tpu.memory_space<vmem>>, vector<1x2x256xf32>
    %77 = vector.shape_cast %76 : vector<1x2x256xf32> to vector<2x256xf32>
    %78 = vector.shape_cast %75 : vector<2x256xf32> to vector<1x2x256xf32>
    tpu.vector_store %arg3[%c0_27, %c0_28, %c0_29], %78 {strides = array<i32>} : memref<3x2x256xf32, #tpu.memory_space<vmem>>, vector<1x2x256xf32>,
    %cst_30 = arith.constant 0.000000e+00 : f32
    %79 = vector.broadcast %cst_30 : f32 to vector<2x256xf32>
    %c12 = arith.constant 12 : index
    %80 = memref.load %arg1[%c12] : memref<36xf32, #tpu.memory_space<smem>>
    %cst_31 = arith.constant 2.000000e+00 : f32
    %81 = arith.mulf %cst_31, %80 : f32
    %82 = vector.broadcast %81 : f32 to vector<2x256xf32>
    %83 = arith.mulf %82, %1 : vector<2x256xf32>
    %84 = arith.addf %79, %83 : vector<2x256xf32>
    %c13 = arith.constant 13 : index
    %85 = memref.load %arg1[%c13] : memref<36xf32, #tpu.memory_space<smem>>
    %cst_32 = arith.constant 2.000000e+00 : f32
    %86 = arith.mulf %cst_32, %85 : f32
    %87 = vector.broadcast %86 : f32 to vector<2x256xf32>
    %88 = arith.mulf %87, %2 : vector<2x256xf32>
    %89 = arith.addf %84, %88 : vector<2x256xf32>
    %c14 = arith.constant 14 : index
    %90 = memref.load %arg1[%c14] : memref<36xf32, #tpu.memory_space<smem>>
    %cst_33 = arith.constant 2.000000e+00 : f32
    %91 = arith.mulf %cst_33, %90 : f32
    %92 = vector.broadcast %91 : f32 to vector<2x256xf32>
    %93 = arith.mulf %92, %3 : vector<2x256xf32>
    %94 = arith.addf %89, %93 : vector<2x256xf32>
    %c15 = arith.constant 15 : index
    %95 = memref.load %arg1[%c15] : memref<36xf32, #tpu.memory_space<smem>>
    %cst_34 = arith.constant 2.000000e+00 : f32
    %96 = arith.mulf %cst_34, %95 : f32
    %97 = vector.broadcast %96 : f32 to vector<2x256xf32>
    %98 = arith.mulf %97, %4 : vector<2x256xf32>
    %99 = arith.addf %94, %98 : vector<2x256xf32>
    %c16 = arith.constant 16 : index
    %100 = memref.load %arg1[%c16] : memref<36xf32, #tpu.memory_space<smem>>
    %cst_35 = arith.constant 2.000000e+00 : f32
    %101 = arith.mulf %cst_35, %100 : f32
    %102 = vector.broadcast %101 : f32 to vector<2x256xf32>
    %103 = arith.mulf %102, %6 : vector<2x256xf32>
    %104 = arith.addf %99, %103 : vector<2x256xf32>
    %c17 = arith.constant 17 : index
    %105 = memref.load %arg1[%c17] : memref<36xf32, #tpu.memory_space<smem>>
    %cst_36 = arith.constant 2.000000e+00 : f32
    %106 = arith.mulf %cst_36, %105 : f32
    %107 = vector.broadcast %106 : f32 to vector<2x256xf32>
    %108 = arith.mulf %107, %7 : vector<2x256xf32>
    %109 = arith.addf %104, %108 : vector<2x256xf32>
    %c18 = arith.constant 18 : index
    %110 = memref.load %arg1[%c18] : memref<36xf32, #tpu.memory_space<smem>>
    %cst_37 = arith.constant 2.000000e+00 : f32
    %111 = arith.mulf %cst_37, %110 : f32
    %112 = vector.broadcast %111 : f32 to vector<2x256xf32>
    %113 = arith.mulf %112, %8 : vector<2x256xf32>
    %114 = arith.addf %109, %113 : vector<2x256xf32>
    %c19 = arith.constant 19 : index
    %115 = memref.load %arg1[%c19] : memref<36xf32, #tpu.memory_space<smem>>
    %cst_38 = arith.constant 2.000000e+00 : f32
    %116 = arith.mulf %cst_38, %115 : f32
    %117 = vector.broadcast %116 : f32 to vector<2x256xf32>
    %118 = arith.mulf %117, %9 : vector<2x256xf32>
    %119 = arith.addf %114, %118 : vector<2x256xf32>
    %c20 = arith.constant 20 : index
    %120 = memref.load %arg1[%c20] : memref<36xf32, #tpu.memory_space<smem>>
    %cst_39 = arith.constant 2.000000e+00 : f32
    %121 = arith.mulf %cst_39, %120 : f32
    %122 = vector.broadcast %121 : f32 to vector<2x256xf32>
    %123 = arith.mulf %122, %11 : vector<2x256xf32>
    %124 = arith.addf %119, %123 : vector<2x256xf32>
    %c21 = arith.constant 21 : index
    %125 = memref.load %arg1[%c21] : memref<36xf32, #tpu.memory_space<smem>>
    %cst_40 = arith.constant 2.000000e+00 : f32
    %126 = arith.mulf %cst_40, %125 : f32
    %127 = vector.broadcast %126 : f32 to vector<2x256xf32>
    %128 = arith.mulf %127, %12 : vector<2x256xf32>
    %129 = arith.addf %124, %128 : vector<2x256xf32>
    %c22 = arith.constant 22 : index
    %130 = memref.load %arg1[%c22] : memref<36xf32, #tpu.memory_space<smem>>
    %cst_41 = arith.constant 2.000000e+00 : f32
    %131 = arith.mulf %cst_41, %130 : f32
    %132 = vector.broadcast %131 : f32 to vector<2x256xf32>
    %133 = arith.mulf %132, %13 : vector<2x256xf32>
    %134 = arith.addf %129, %133 : vector<2x256xf32>
    %c23 = arith.constant 23 : index
    %135 = memref.load %arg1[%c23] : memref<36xf32, #tpu.memory_space<smem>>
    %cst_42 = arith.constant 2.000000e+00 : f32
    %136 = arith.mulf %cst_42, %135 : f32
    %137 = vector.broadcast %136 : f32 to vector<2x256xf32>
    %138 = arith.mulf %137, %14 : vector<2x256xf32>
    %139 = arith.addf %134, %138 : vector<2x256xf32>
    %c1_43 = arith.constant 1 : index
    %c0_44 = arith.constant 0 : index
    %c0_45 = arith.constant 0 : index
    %140 = vector.load %arg3[%c1_43, %c0_44, %c0_45] : memref<3x2x256xf32, #tpu.memory_space<vmem>>, vector<1x2x256xf32>
    %141 = vector.shape_cast %140 : vector<1x2x256xf32> to vector<2x256xf32>
    %142 = vector.shape_cast %139 : vector<2x256xf32> to vector<1x2x256xf32>
    tpu.vector_store %arg3[%c1_43, %c0_44, %c0_45], %142 {strides = array<i32>} : memref<3x2x256xf32, #tpu.memory_space<vmem>>, vector<1x2x256xf32>,
    %cst_46 = arith.constant 0.000000e+00 : f32
    %143 = vector.broadcast %cst_46 : f32 to vector<2x256xf32>
    %c24 = arith.constant 24 : index
    %144 = memref.load %arg1[%c24] : memref<36xf32, #tpu.memory_space<smem>>
    %cst_47 = arith.constant 2.000000e+00 : f32
    %145 = arith.mulf %cst_47, %144 : f32
    %146 = vector.broadcast %145 : f32 to vector<2x256xf32>
    %147 = arith.mulf %146, %1 : vector<2x256xf32>
    %148 = arith.addf %143, %147 : vector<2x256xf32>
    %c25 = arith.constant 25 : index
    %149 = memref.load %arg1[%c25] : memref<36xf32, #tpu.memory_space<smem>>
    %cst_48 = arith.constant 2.000000e+00 : f32
    %150 = arith.mulf %cst_48, %149 : f32
    %151 = vector.broadcast %150 : f32 to vector<2x256xf32>
    %152 = arith.mulf %151, %2 : vector<2x256xf32>
    %153 = arith.addf %148, %152 : vector<2x256xf32>
    %c26 = arith.constant 26 : index
    %154 = memref.load %arg1[%c26] : memref<36xf32, #tpu.memory_space<smem>>
    %cst_49 = arith.constant 2.000000e+00 : f32
    %155 = arith.mulf %cst_49, %154 : f32
    %156 = vector.broadcast %155 : f32 to vector<2x256xf32>
    %157 = arith.mulf %156, %3 : vector<2x256xf32>
    %158 = arith.addf %153, %157 : vector<2x256xf32>
    %c27 = arith.constant 27 : index
    %159 = memref.load %arg1[%c27] : memref<36xf32, #tpu.memory_space<smem>>
    %cst_50 = arith.constant 2.000000e+00 : f32
    %160 = arith.mulf %cst_50, %159 : f32
    %161 = vector.broadcast %160 : f32 to vector<2x256xf32>
    %162 = arith.mulf %161, %4 : vector<2x256xf32>
    %163 = arith.addf %158, %162 : vector<2x256xf32>
    %c28 = arith.constant 28 : index
    %164 = memref.load %arg1[%c28] : memref<36xf32, #tpu.memory_space<smem>>
    %cst_51 = arith.constant 2.000000e+00 : f32
    %165 = arith.mulf %cst_51, %164 : f32
    %166 = vector.broadcast %165 : f32 to vector<2x256xf32>
    %167 = arith.mulf %166, %6 : vector<2x256xf32>
    %168 = arith.addf %163, %167 : vector<2x256xf32>
    %c29 = arith.constant 29 : index
    %169 = memref.load %arg1[%c29] : memref<36xf32, #tpu.memory_space<smem>>
    %cst_52 = arith.constant 2.000000e+00 : f32
    %170 = arith.mulf %cst_52, %169 : f32
    %171 = vector.broadcast %170 : f32 to vector<2x256xf32>
    %172 = arith.mulf %171, %7 : vector<2x256xf32>
    %173 = arith.addf %168, %172 : vector<2x256xf32>
    %c30 = arith.constant 30 : index
    %174 = memref.load %arg1[%c30] : memref<36xf32, #tpu.memory_space<smem>>
    %cst_53 = arith.constant 2.000000e+00 : f32
    %175 = arith.mulf %cst_53, %174 : f32
    %176 = vector.broadcast %175 : f32 to vector<2x256xf32>
    %177 = arith.mulf %176, %8 : vector<2x256xf32>
    %178 = arith.addf %173, %177 : vector<2x256xf32>
    %c31 = arith.constant 31 : index
    %179 = memref.load %arg1[%c31] : memref<36xf32, #tpu.memory_space<smem>>
    %cst_54 = arith.constant 2.000000e+00 : f32
    %180 = arith.mulf %cst_54, %179 : f32
    %181 = vector.broadcast %180 : f32 to vector<2x256xf32>
    %182 = arith.mulf %181, %9 : vector<2x256xf32>
    %183 = arith.addf %178, %182 : vector<2x256xf32>
    %c32 = arith.constant 32 : index
    %184 = memref.load %arg1[%c32] : memref<36xf32, #tpu.memory_space<smem>>
    %cst_55 = arith.constant 2.000000e+00 : f32
    %185 = arith.mulf %cst_55, %184 : f32
    %186 = vector.broadcast %185 : f32 to vector<2x256xf32>
    %187 = arith.mulf %186, %11 : vector<2x256xf32>
    %188 = arith.addf %183, %187 : vector<2x256xf32>
    %c33 = arith.constant 33 : index
    %189 = memref.load %arg1[%c33] : memref<36xf32, #tpu.memory_space<smem>>
    %cst_56 = arith.constant 2.000000e+00 : f32
    %190 = arith.mulf %cst_56, %189 : f32
    %191 = vector.broadcast %190 : f32 to vector<2x256xf32>
    %192 = arith.mulf %191, %12 : vector<2x256xf32>
    %193 = arith.addf %188, %192 : vector<2x256xf32>
    %c34 = arith.constant 34 : index
    %194 = memref.load %arg1[%c34] : memref<36xf32, #tpu.memory_space<smem>>
    %cst_57 = arith.constant 2.000000e+00 : f32
    %195 = arith.mulf %cst_57, %194 : f32
    %196 = vector.broadcast %195 : f32 to vector<2x256xf32>
    %197 = arith.mulf %196, %13 : vector<2x256xf32>
    %198 = arith.addf %193, %197 : vector<2x256xf32>
    %c35 = arith.constant 35 : index
    %199 = memref.load %arg1[%c35] : memref<36xf32, #tpu.memory_space<smem>>
    %cst_58 = arith.constant 2.000000e+00 : f32
    %200 = arith.mulf %cst_58, %199 : f32
    %201 = vector.broadcast %200 : f32 to vector<2x256xf32>
    %202 = arith.mulf %201, %14 : vector<2x256xf32>
    %203 = arith.addf %198, %202 : vector<2x256xf32>
    %c2_59 = arith.constant 2 : index
    %c0_60 = arith.constant 0 : index
    %c0_61 = arith.constant 0 : index
    %204 = vector.load %arg3[%c2_59, %c0_60, %c0_61] : memref<3x2x256xf32, #tpu.memory_space<vmem>>, vector<1x2x256xf32>
    %205 = vector.shape_cast %204 : vector<1x2x256xf32> to vector<2x256xf32>
    %206 = vector.shape_cast %203 : vector<2x256xf32> to vector<1x2x256xf32>
    tpu.vector_store %arg3[%c2_59, %c0_60, %c0_61], %206 {strides = array<i32>} : memref<3x2x256xf32, #tpu.memory_space<vmem>>, vector<1x2x256xf32>,
    return
  }
  func.func @transform_0(%arg0: i32) -> i32 {
    %c0_i32 = arith.constant 0 : i32
    %c0_i32_0 = arith.constant 0 : i32
    return %c0_i32 : i32
  }
  func.func @transform_1(%arg0: i32) -> (i32, i32, i32) {
    %c0_i32 = arith.constant 0 : i32
    %c0_i32_0 = arith.constant 0 : i32
    %c0_i32_1 = arith.constant 0 : i32
    return %c0_i32, %arg0, %c0_i32_0 : i32, i32, i32
  }
  func.func @transform_2(%arg0: i32) -> (i32, i32, i32) {
    %c0_i32 = arith.constant 0 : i32
    %c0_i32_0 = arith.constant 0 : i32
    %c0_i32_1 = arith.constant 0 : i32
    return %c0_i32, %arg0, %c0_i32_0 : i32, i32, i32
  }
}

</mosaic_0001>

<llo_original>
// kernel: testmodel2_forward_pallas.1
$region0: #{testmodel2_forward_pallas.1}
  #allocation0 [shape = 'u32[]', space=smem, size = 0x4, offset = 0x4, fixed_abs, tag = 'smem constant byte address 0x4 - core index']
  #allocation1 [shape = 'u32[144,128]{1,0:T(1,128)}', space=vmem, size = 0x12000, scoped, tag = 'internal scratch']
  %s0 = inlined_call_operand.vmem [shape: f32[36], index: 0, kind: input, shape index: {}]
  %s1 = inlined_call_operand.vmem [shape: f32[3,2,256], index: 1, kind: input, shape index: {}]
  %s2 = inlined_call_operand.vmem [shape: f32[3,2,256], index: 2, kind: output, shape index: {}]
  %s3 = sld [smem:[#allocation0]]
  $region22: #{testmodel2_forward_pallas.1} parent=0
    _
  %s5 = ssub.s32 1, %s3
  %s6 = scalar_select 0, %s5, %s3
  $region1: #{testmodel2_forward_pallas.1} parent=0
    #allocation2 [shape = 'u8[512]{0}', space=smem, size = 0x200, scoped, tag = 'input window, operand 0, single buffered']
    #allocation3 [shape = 's32[1]{0}', space=sflag, size = 0x4, scoped, tag = 'scoped memory for testmodel2_forward_pallas.1']
    %7 = vsyncpa [#allocation3], 0
    // Predicated region
    $region2: #{testmodel2_forward_pallas.1} parent=1 // pred_check
      _
    $region3: #{testmodel2_forward_pallas.1} parent=1 // pred_check_branch
      %9 = sbr.rel (0) target = $region5
    $region4: #{testmodel2_forward_pallas.1} parent=1 // pred_region
      %s11 = ssub.s32 16, 16
      %12 = vsyncadd [#allocation3], %s11
      %s14 = sshll.u32 %s0, 4
      %s15 = int_to_ptr.vmem [resolvable:$true] %s14
      %17 = dma.vmem_to_smem %s15, 16, [#allocation2], [#allocation3]
    $region5: #{testmodel2_forward_pallas.1} parent=1 // pred_fallthru
      _
    // Predicated region
    $region6: #{testmodel2_forward_pallas.1} parent=1 // pred_check
      _
    $region7: #{testmodel2_forward_pallas.1} parent=1 // pred_check_branch
      %19 = sbr.rel (0) target = $region9
    $region8: #{testmodel2_forward_pallas.1} parent=1 // pred_region
      _
    $region9: #{testmodel2_forward_pallas.1} parent=1 // pred_fallthru
      _
    // Predicated region
    $region10: #{testmodel2_forward_pallas.1} parent=1 // pred_check
      _
    $region11: #{testmodel2_forward_pallas.1} parent=1 // pred_check_branch
      %21 = sbr.rel (0) target = $region13
    $region12: #{testmodel2_forward_pallas.1} parent=1 // pred_region
      %22 = dma.done [#allocation3], 16
    $region13: #{testmodel2_forward_pallas.1} parent=1 // pred_fallthru
      _
    %23 = sfence
    %v24 = vld [vmem:[%s1] sm:$0xf]
    %v27 = vunpack.c.l.s4 1983009808
    %v28 = vunpack.c.0.s8 %v27
    %v29 = vlaneseq
    %v30 = vshrl.u32 %v29, 7
    %v31 = vsub.s32 %v28, %v30
    %v32 = vrot.slane %v24, %v31
    %v33 = vcombine.high %v32, %v32
    %36 = vrot.lane.b32.xlu0 %v32, 127
    %v37 = vpop.permute.xlu0 %36
    %38 = vrot.lane.b32.xlu0 %v33, 127
    %v39 = vpop.permute.xlu0 %38
    %v40 = vlaneseq
    %v41 = vand.u32 %v40, 127
    %vm42 = vcmp.lt.s32.totalorder %v41, 127
    %v43 = vsel %vm42, %v37, %v39
    %v44 = vsel %vm42, %v39, %v37
    %45 = vrot.lane.b32.xlu0 %v32, 112
    %v46 = vpop.permute.xlu0 %45
    %47 = vrot.lane.b32.xlu0 %v33, 112
    %v48 = vpop.permute.xlu0 %47
    %vm49 = vcmp.lt.s32.totalorder %v41, 112
    %v50 = vsel %vm49, %v46, %v48
    %v51 = vsel %vm49, %v48, %v46
    %52 = vrot.lane.b32.xlu0 %v32, 111
    %v53 = vpop.permute.xlu0 %52
    %54 = vrot.lane.b32.xlu0 %v33, 111
    %v55 = vpop.permute.xlu0 %54
    %vm56 = vcmp.lt.s32.totalorder %v41, 111
    %v57 = vsel %vm56, %v53, %v55
    %v58 = vsel %vm56, %v55, %v53
    %s59 = scalar_lea.vmem %s1, 4
    %v60 = vld [vmem:[%s59] sm:$0xf]
    %v63 = vunpack.c.l.s4 1983009808
    %v64 = vunpack.c.0.s8 %v63
    %v65 = vlaneseq
    %v66 = vshrl.u32 %v65, 7
    %v67 = vsub.s32 %v64, %v66
    %v68 = vrot.slane %v60, %v67
    %v69 = vcombine.high %v68, %v68
    %72 = vrot.lane.b32.xlu0 %v68, 127
    %v73 = vpop.permute.xlu0 %72
    %74 = vrot.lane.b32.xlu0 %v69, 127
    %v75 = vpop.permute.xlu0 %74
    %v76 = vsel %vm42, %v73, %v75
    %v77 = vsel %vm42, %v75, %v73
    %78 = vrot.lane.b32.xlu0 %v68, 112
    %v79 = vpop.permute.xlu0 %78
    %80 = vrot.lane.b32.xlu0 %v69, 112
    %v81 = vpop.permute.xlu0 %80
    %v82 = vsel %vm49, %v79, %v81
    %v83 = vsel %vm49, %v81, %v79
    %84 = vrot.lane.b32.xlu0 %v68, 111
    %v85 = vpop.permute.xlu0 %84
    %86 = vrot.lane.b32.xlu0 %v69, 111
    %v87 = vpop.permute.xlu0 %86
    %v88 = vsel %vm56, %v85, %v87
    %v89 = vsel %vm56, %v87, %v85
    %s90 = scalar_lea.vmem %s1, 8
    %v91 = vld [vmem:[%s90] sm:$0xf]
    %v94 = vunpack.c.l.s4 1983009808
    %v95 = vunpack.c.0.s8 %v94
    %v96 = vlaneseq
    %v97 = vshrl.u32 %v96, 7
    %v98 = vsub.s32 %v95, %v97
    %v99 = vrot.slane %v91, %v98
    %v100 = vcombine.high %v99, %v99
    %103 = vrot.lane.b32.xlu0 %v99, 127
    %v104 = vpop.permute.xlu0 %103
    %105 = vrot.lane.b32.xlu0 %v100, 127
    %v106 = vpop.permute.xlu0 %105
    %v107 = vsel %vm42, %v104, %v106
    %v108 = vsel %vm42, %v106, %v104
    %109 = vrot.lane.b32.xlu0 %v99, 112
    %v110 = vpop.permute.xlu0 %109
    %111 = vrot.lane.b32.xlu0 %v100, 112
    %v112 = vpop.permute.xlu0 %111
    %v113 = vsel %vm49, %v110, %v112
    %v114 = vsel %vm49, %v112, %v110
    %115 = vrot.lane.b32.xlu0 %v99, 111
    %v116 = vpop.permute.xlu0 %115
    %117 = vrot.lane.b32.xlu0 %v100, 111
    %v118 = vpop.permute.xlu0 %117
    %v119 = vsel %vm56, %v116, %v118
    %v120 = vsel %vm56, %v118, %v116
    %s121 = sld [smem:[#allocation2]]
    %s122 = smul.f32 %s121, 2.0
    %v123 = vstv %s122
    %v124 = vmul.f32 %v123, %v24
    %v125 = vadd.f32 %v124, 0.0
    %s126 = sld [smem:[#allocation2 + $0x1]]
    %s127 = smul.f32 %s126, 2.0
    %v128 = vstv %s127
    %v129 = vmul.f32 %v128, %v43
    %v130 = vmul.f32 %v128, %v44
    %v133 = vcombine.low %v129, %v130
    %v135 = vunpack.c.l.s4 1983009808
    %v136 = vunpack.c.0.s8 %v135
    %v137 = vlaneseq
    %v138 = vshrl.u32 %v137, 7
    %v139 = vsub.s32 %v136, %v138
    %v140 = vrot.slane %v133, %v139
    %v142 = vadd.f32 %v125, %v140
    %s143 = sld [smem:[#allocation2 + $0x2]]
    %s144 = smul.f32 %s143, 2.0
    %v145 = vstv %s144
    %v146 = vmul.f32 %v145, %v50
    %v147 = vmul.f32 %v145, %v51
    %v150 = vcombine.low %v146, %v147
    %v152 = vunpack.c.l.s4 1983009808
    %v153 = vunpack.c.0.s8 %v152
    %v154 = vlaneseq
    %v155 = vshrl.u32 %v154, 7
    %v156 = vsub.s32 %v153, %v155
    %v157 = vrot.slane %v150, %v156
    %v159 = vadd.f32 %v142, %v157
    %s160 = sld [smem:[#allocation2 + $0x3]]
    %s161 = smul.f32 %s160, 2.0
    %v162 = vstv %s161
    %v163 = vmul.f32 %v162, %v57
    %v164 = vmul.f32 %v162, %v58
    %v167 = vcombine.low %v163, %v164
    %v169 = vunpack.c.l.s4 1983009808
    %v170 = vunpack.c.0.s8 %v169
    %v171 = vlaneseq
    %v172 = vshrl.u32 %v171, 7
    %v173 = vsub.s32 %v170, %v172
    %v174 = vrot.slane %v167, %v173
    %v176 = vadd.f32 %v159, %v174
    %s177 = sld [smem:[#allocation2 + $0x4]]
    %s178 = smul.f32 %s177, 2.0
    %v179 = vstv %s178
    %v180 = vmul.f32 %v179, %v60
    %v181 = vadd.f32 %v176, %v180
    %s182 = sld [smem:[#allocation2 + $0x5]]
    %s183 = smul.f32 %s182, 2.0
    %v184 = vstv %s183
    %v185 = vmul.f32 %v184, %v76
    %v186 = vmul.f32 %v184, %v77
    %v189 = vcombine.low %v185, %v186
    %v191 = vunpack.c.l.s4 1983009808
    %v192 = vunpack.c.0.s8 %v191
    %v193 = vlaneseq
    %v194 = vshrl.u32 %v193, 7
    %v195 = vsub.s32 %v192, %v194
    %v196 = vrot.slane %v189, %v195
    %v198 = vadd.f32 %v181, %v196
    %s199 = sld [smem:[#allocation2 + $0x6]]
    %s200 = smul.f32 %s199, 2.0
    %v201 = vstv %s200
    %v202 = vmul.f32 %v201, %v82
    %v203 = vmul.f32 %v201, %v83
    %v206 = vcombine.low %v202, %v203
    %v208 = vunpack.c.l.s4 1983009808
    %v209 = vunpack.c.0.s8 %v208
    %v210 = vlaneseq
    %v211 = vshrl.u32 %v210, 7
    %v212 = vsub.s32 %v209, %v211
    %v213 = vrot.slane %v206, %v212
    %v215 = vadd.f32 %v198, %v213
    %s216 = sld [smem:[#allocation2 + $0x7]]
    %s217 = smul.f32 %s216, 2.0
    %v218 = vstv %s217
    %v219 = vmul.f32 %v218, %v88
    %v220 = vmul.f32 %v218, %v89
    %v223 = vcombine.low %v219, %v220
    %v225 = vunpack.c.l.s4 1983009808
    %v226 = vunpack.c.0.s8 %v225
    %v227 = vlaneseq
    %v228 = vshrl.u32 %v227, 7
    %v229 = vsub.s32 %v226, %v228
    %v230 = vrot.slane %v223, %v229
    %v232 = vadd.f32 %v215, %v230
    %s233 = sld [smem:[#allocation2 + $0x8]]
    %s234 = smul.f32 %s233, 2.0
    %v235 = vstv %s234
    %v236 = vmul.f32 %v235, %v91
    %v237 = vadd.f32 %v232, %v236
    %s238 = sld [smem:[#allocation2 + $0x9]]
    %s239 = smul.f32 %s238, 2.0
    %v240 = vstv %s239
    %v241 = vmul.f32 %v240, %v107
    %v242 = vmul.f32 %v240, %v108
    %v245 = vcombine.low %v241, %v242
    %v247 = vunpack.c.l.s4 1983009808
    %v248 = vunpack.c.0.s8 %v247
    %v249 = vlaneseq
    %v250 = vshrl.u32 %v249, 7
    %v251 = vsub.s32 %v248, %v250
    %v252 = vrot.slane %v245, %v251
    %v254 = vadd.f32 %v237, %v252
    %s255 = sld [smem:[#allocation2 + $0xa]]
    %s256 = smul.f32 %s255, 2.0
    %v257 = vstv %s256
    %v258 = vmul.f32 %v257, %v113
    %v259 = vmul.f32 %v257, %v114
    %v262 = vcombine.low %v258, %v259
    %v264 = vunpack.c.l.s4 1983009808
    %v265 = vunpack.c.0.s8 %v264
    %v266 = vlaneseq
    %v267 = vshrl.u32 %v266, 7
    %v268 = vsub.s32 %v265, %v267
    %v269 = vrot.slane %v262, %v268
    %v271 = vadd.f32 %v254, %v269
    %s272 = sld [smem:[#allocation2 + $0xb]]
    %s273 = smul.f32 %s272, 2.0
    %v274 = vstv %s273
    %v275 = vmul.f32 %v274, %v119
    %v276 = vmul.f32 %v274, %v120
    %v279 = vcombine.low %v275, %v276
    %v281 = vunpack.c.l.s4 1983009808
    %v282 = vunpack.c.0.s8 %v281
    %v283 = vlaneseq
    %v284 = vshrl.u32 %v283, 7
    %v285 = vsub.s32 %v282, %v284
    %v286 = vrot.slane %v279, %v285
    %v288 = vadd.f32 %v271, %v286
    %289 = vst [vmem:[%s2] sm:$0xf] %v288
    %s290 = sld [smem:[#allocation2 + $0xc]]
    %s291 = smul.f32 %s290, 2.0
    %v292 = vstv %s291
    %v293 = vmul.f32 %v292, %v24
    %v294 = vadd.f32 %v293, 0.0
    %s295 = sld [smem:[#allocation2 + $0xd]]
    %s296 = smul.f32 %s295, 2.0
    %v297 = vstv %s296
    %v298 = vmul.f32 %v297, %v43
    %v299 = vmul.f32 %v297, %v44
    %v302 = vcombine.low %v298, %v299
    %v304 = vunpack.c.l.s4 1983009808
    %v305 = vunpack.c.0.s8 %v304
    %v306 = vlaneseq
    %v307 = vshrl.u32 %v306, 7
    %v308 = vsub.s32 %v305, %v307
    %v309 = vrot.slane %v302, %v308
    %v311 = vadd.f32 %v294, %v309
    %s312 = sld [smem:[#allocation2 + $0xe]]
    %s313 = smul.f32 %s312, 2.0
    %v314 = vstv %s313
    %v315 = vmul.f32 %v314, %v50
    %v316 = vmul.f32 %v314, %v51
    %v319 = vcombine.low %v315, %v316
    %v321 = vunpack.c.l.s4 1983009808
    %v322 = vunpack.c.0.s8 %v321
    %v323 = vlaneseq
    %v324 = vshrl.u32 %v323, 7
    %v325 = vsub.s32 %v322, %v324
    %v326 = vrot.slane %v319, %v325
    %v328 = vadd.f32 %v311, %v326
    %s329 = sld [smem:[#allocation2 + $0xf]]
    %s330 = smul.f32 %s329, 2.0
    %v331 = vstv %s330
    %v332 = vmul.f32 %v331, %v57
    %v333 = vmul.f32 %v331, %v58
    %v336 = vcombine.low %v332, %v333
    %v338 = vunpack.c.l.s4 1983009808
    %v339 = vunpack.c.0.s8 %v338
    %v340 = vlaneseq
    %v341 = vshrl.u32 %v340, 7
    %v342 = vsub.s32 %v339, %v341
    %v343 = vrot.slane %v336, %v342
    %v345 = vadd.f32 %v328, %v343
    %s346 = sld [smem:[#allocation2 + $0x10]]
    %s347 = smul.f32 %s346, 2.0
    %v348 = vstv %s347
    %v349 = vmul.f32 %v348, %v60
    %v350 = vadd.f32 %v345, %v349
    %s351 = sld [smem:[#allocation2 + $0x11]]
    %s352 = smul.f32 %s351, 2.0
    %v353 = vstv %s352
    %v354 = vmul.f32 %v353, %v76
    %v355 = vmul.f32 %v353, %v77
    %v358 = vcombine.low %v354, %v355
    %v360 = vunpack.c.l.s4 1983009808
    %v361 = vunpack.c.0.s8 %v360
    %v362 = vlaneseq
    %v363 = vshrl.u32 %v362, 7
    %v364 = vsub.s32 %v361, %v363
    %v365 = vrot.slane %v358, %v364
    %v367 = vadd.f32 %v350, %v365
    %s368 = sld [smem:[#allocation2 + $0x12]]
    %s369 = smul.f32 %s368, 2.0
    %v370 = vstv %s369
    %v371 = vmul.f32 %v370, %v82
    %v372 = vmul.f32 %v370, %v83
    %v375 = vcombine.low %v371, %v372
    %v377 = vunpack.c.l.s4 1983009808
    %v378 = vunpack.c.0.s8 %v377
    %v379 = vlaneseq
    %v380 = vshrl.u32 %v379, 7
    %v381 = vsub.s32 %v378, %v380
    %v382 = vrot.slane %v375, %v381
    %v384 = vadd.f32 %v367, %v382
    %s385 = sld [smem:[#allocation2 + $0x13]]
    %s386 = smul.f32 %s385, 2.0
    %v387 = vstv %s386
    %v388 = vmul.f32 %v387, %v88
    %v389 = vmul.f32 %v387, %v89
    %v392 = vcombine.low %v388, %v389
    %v394 = vunpack.c.l.s4 1983009808
    %v395 = vunpack.c.0.s8 %v394
    %v396 = vlaneseq
    %v397 = vshrl.u32 %v396, 7
    %v398 = vsub.s32 %v395, %v397
    %v399 = vrot.slane %v392, %v398
    %v401 = vadd.f32 %v384, %v399
    %s402 = sld [smem:[#allocation2 + $0x14]]
    %s403 = smul.f32 %s402, 2.0
    %v404 = vstv %s403
    %v405 = vmul.f32 %v404, %v91
    %v406 = vadd.f32 %v401, %v405
    %s407 = sld [smem:[#allocation2 + $0x15]]
    %s408 = smul.f32 %s407, 2.0
    %v409 = vstv %s408
    %v410 = vmul.f32 %v409, %v107
    %v411 = vmul.f32 %v409, %v108
    %v414 = vcombine.low %v410, %v411
    %v416 = vunpack.c.l.s4 1983009808
    %v417 = vunpack.c.0.s8 %v416
    %v418 = vlaneseq
    %v419 = vshrl.u32 %v418, 7
    %v420 = vsub.s32 %v417, %v419
    %v421 = vrot.slane %v414, %v420
    %v423 = vadd.f32 %v406, %v421
    %s424 = sld [smem:[#allocation2 + $0x16]]
    %s425 = smul.f32 %s424, 2.0
    %v426 = vstv %s425
    %v427 = vmul.f32 %v426, %v113
    %v428 = vmul.f32 %v426, %v114
    %v431 = vcombine.low %v427, %v428
    %v433 = vunpack.c.l.s4 1983009808
    %v434 = vunpack.c.0.s8 %v433
    %v435 = vlaneseq
    %v436 = vshrl.u32 %v435, 7
    %v437 = vsub.s32 %v434, %v436
    %v438 = vrot.slane %v431, %v437
    %v440 = vadd.f32 %v423, %v438
    %s441 = sld [smem:[#allocation2 + $0x17]]
    %s442 = smul.f32 %s441, 2.0
    %v443 = vstv %s442
    %v444 = vmul.f32 %v443, %v119
    %v445 = vmul.f32 %v443, %v120
    %v448 = vcombine.low %v444, %v445
    %v450 = vunpack.c.l.s4 1983009808
    %v451 = vunpack.c.0.s8 %v450
    %v452 = vlaneseq
    %v453 = vshrl.u32 %v452, 7
    %v454 = vsub.s32 %v451, %v453
    %v455 = vrot.slane %v448, %v454
    %v457 = vadd.f32 %v440, %v455
    %s458 = scalar_lea.vmem %s2, 4
    %459 = vst [vmem:[%s458] sm:$0xf] %v457
    %s460 = sld [smem:[#allocation2 + $0x18]]
    %s461 = smul.f32 %s460, 2.0
    %v462 = vstv %s461
    %v463 = vmul.f32 %v462, %v24
    %v464 = vadd.f32 %v463, 0.0
    %s465 = sld [smem:[#allocation2 + $0x19]]
    %s466 = smul.f32 %s465, 2.0
    %v467 = vstv %s466
    %v468 = vmul.f32 %v467, %v43
    %v469 = vmul.f32 %v467, %v44
    %v472 = vcombine.low %v468, %v469
    %v474 = vunpack.c.l.s4 1983009808
    %v475 = vunpack.c.0.s8 %v474
    %v476 = vlaneseq
    %v477 = vshrl.u32 %v476, 7
    %v478 = vsub.s32 %v475, %v477
    %v479 = vrot.slane %v472, %v478
    %v481 = vadd.f32 %v464, %v479
    %s482 = sld [smem:[#allocation2 + $0x1a]]
    %s483 = smul.f32 %s482, 2.0
    %v484 = vstv %s483
    %v485 = vmul.f32 %v484, %v50
    %v486 = vmul.f32 %v484, %v51
    %v489 = vcombine.low %v485, %v486
    %v491 = vunpack.c.l.s4 1983009808
    %v492 = vunpack.c.0.s8 %v491
    %v493 = vlaneseq
    %v494 = vshrl.u32 %v493, 7
    %v495 = vsub.s32 %v492, %v494
    %v496 = vrot.slane %v489, %v495
    %v498 = vadd.f32 %v481, %v496
    %s499 = sld [smem:[#allocation2 + $0x1b]]
    %s500 = smul.f32 %s499, 2.0
    %v501 = vstv %s500
    %v502 = vmul.f32 %v501, %v57
    %v503 = vmul.f32 %v501, %v58
    %v506 = vcombine.low %v502, %v503
    %v508 = vunpack.c.l.s4 1983009808
    %v509 = vunpack.c.0.s8 %v508
    %v510 = vlaneseq
    %v511 = vshrl.u32 %v510, 7
    %v512 = vsub.s32 %v509, %v511
    %v513 = vrot.slane %v506, %v512
    %v515 = vadd.f32 %v498, %v513
    %s516 = sld [smem:[#allocation2 + $0x1c]]
    %s517 = smul.f32 %s516, 2.0
    %v518 = vstv %s517
    %v519 = vmul.f32 %v518, %v60
    %v520 = vadd.f32 %v515, %v519
    %s521 = sld [smem:[#allocation2 + $0x1d]]
    %s522 = smul.f32 %s521, 2.0
    %v523 = vstv %s522
    %v524 = vmul.f32 %v523, %v76
    %v525 = vmul.f32 %v523, %v77
    %v528 = vcombine.low %v524, %v525
    %v530 = vunpack.c.l.s4 1983009808
    %v531 = vunpack.c.0.s8 %v530
    %v532 = vlaneseq
    %v533 = vshrl.u32 %v532, 7
    %v534 = vsub.s32 %v531, %v533
    %v535 = vrot.slane %v528, %v534
    %v537 = vadd.f32 %v520, %v535
    %s538 = sld [smem:[#allocation2 + $0x1e]]
    %s539 = smul.f32 %s538, 2.0
    %v540 = vstv %s539
    %v541 = vmul.f32 %v540, %v82
    %v542 = vmul.f32 %v540, %v83
    %v545 = vcombine.low %v541, %v542
    %v547 = vunpack.c.l.s4 1983009808
    %v548 = vunpack.c.0.s8 %v547
    %v549 = vlaneseq
    %v550 = vshrl.u32 %v549, 7
    %v551 = vsub.s32 %v548, %v550
    %v552 = vrot.slane %v545, %v551
    %v554 = vadd.f32 %v537, %v552
    %s555 = sld [smem:[#allocation2 + $0x1f]]
    %s556 = smul.f32 %s555, 2.0
    %v557 = vstv %s556
    %v558 = vmul.f32 %v557, %v88
    %v559 = vmul.f32 %v557, %v89
    %v562 = vcombine.low %v558, %v559
    %v564 = vunpack.c.l.s4 1983009808
    %v565 = vunpack.c.0.s8 %v564
    %v566 = vlaneseq
    %v567 = vshrl.u32 %v566, 7
    %v568 = vsub.s32 %v565, %v567
    %v569 = vrot.slane %v562, %v568
    %v571 = vadd.f32 %v554, %v569
    %s572 = sld [smem:[#allocation2 + $0x20]]
    %s573 = smul.f32 %s572, 2.0
    %v574 = vstv %s573
    %v575 = vmul.f32 %v574, %v91
    %v576 = vadd.f32 %v571, %v575
    %s577 = sld [smem:[#allocation2 + $0x21]]
    %s578 = smul.f32 %s577, 2.0
    %v579 = vstv %s578
    %v580 = vmul.f32 %v579, %v107
    %v581 = vmul.f32 %v579, %v108
    %v584 = vcombine.low %v580, %v581
    %v586 = vunpack.c.l.s4 1983009808
    %v587 = vunpack.c.0.s8 %v586
    %v588 = vlaneseq
    %v589 = vshrl.u32 %v588, 7
    %v590 = vsub.s32 %v587, %v589
    %v591 = vrot.slane %v584, %v590
    %v593 = vadd.f32 %v576, %v591
    %s594 = sld [smem:[#allocation2 + $0x22]]
    %s595 = smul.f32 %s594, 2.0
    %v596 = vstv %s595
    %v597 = vmul.f32 %v596, %v113
    %v598 = vmul.f32 %v596, %v114
    %v601 = vcombine.low %v597, %v598
    %v603 = vunpack.c.l.s4 1983009808
    %v604 = vunpack.c.0.s8 %v603
    %v605 = vlaneseq
    %v606 = vshrl.u32 %v605, 7
    %v607 = vsub.s32 %v604, %v606
    %v608 = vrot.slane %v601, %v607
    %v610 = vadd.f32 %v593, %v608
    %s611 = sld [smem:[#allocation2 + $0x23]]
    %s612 = smul.f32 %s611, 2.0
    %v613 = vstv %s612
    %v614 = vmul.f32 %v613, %v119
    %v615 = vmul.f32 %v613, %v120
    %v618 = vcombine.low %v614, %v615
    %v620 = vunpack.c.l.s4 1983009808
    %v621 = vunpack.c.0.s8 %v620
    %v622 = vlaneseq
    %v623 = vshrl.u32 %v622, 7
    %v624 = vsub.s32 %v621, %v623
    %v625 = vrot.slane %v618, %v624
    %v627 = vadd.f32 %v610, %v625
    %s628 = scalar_lea.vmem %s2, 8
    %629 = vst [vmem:[%s628] sm:$0xf] %v627
    // Predicated region
    $region14: #{testmodel2_forward_pallas.1} parent=1 // pred_check
      _
    $region15: #{testmodel2_forward_pallas.1} parent=1 // pred_check_branch
      %631 = sbr.rel (0) target = $region17
    $region16: #{testmodel2_forward_pallas.1} parent=1 // pred_region
      _
    $region17: #{testmodel2_forward_pallas.1} parent=1 // pred_fallthru
      _
    // Predicated region
    $region18: #{testmodel2_forward_pallas.1} parent=1 // pred_check
      _
    $region19: #{testmodel2_forward_pallas.1} parent=1 // pred_check_branch
      %633 = sbr.rel (0) target = $region21
    $region20: #{testmodel2_forward_pallas.1} parent=1 // pred_region
      _
    $region21: #{testmodel2_forward_pallas.1} parent=1 // pred_fallthru
      _
    %634 = vsyncpa [#allocation3], 1

</llo_original>
